<compile_context>
chip_gen: v5e
topology: v5e:2x2
jax: 0.10.0
libtpu: 0.0.40
codegen_flags: <defaults>
</compile_context>

<pallas_src>
import functools

import jax
import jax.numpy as jnp
from jax.experimental import pallas as pl
from jax.experimental.pallas import tpu as pltpu

_INV_SQRT2 = 0.7071067811865476
_SQRT_2_OVER_PI = 0.7978845608028654
_BN_EPS = 1e-5
_LANE = 128
_SUBLANE = 8


def _round_up(x, m):
    return (x + m - 1) // m * m


def _vmem_capacity_bytes():
    """Physical VMEM of the local TPU generation (v7x floor as fallback)."""
    try:
        cap = int(getattr(pltpu.get_tpu_info(), "vmem_capacity_bytes", 0))
        if cap > 0:
            return cap
    except Exception:
        pass
    return 64 << 20  # v7x has the smallest VMEM -> safe assumption everywhere


def _plan_tiles(m_rows, kpad, cpad, tm_max):
    """Pick the M-tile height and a vmem_limit sized to the real working set."""
    phys = _vmem_capacity_bytes()
    # Budget for the pipelined working set; leaves >half of physical VMEM for
    # compiler scratch.  ~25 MiB on v7x (64 MiB), 48 MiB on v5e/v6e (128 MiB).
    budget = min(int(phys * 0.40), 48 << 20)

    tm = max(_SUBLANE, min(_round_up(tm_max, _SUBLANE), _round_up(m_rows, _SUBLANE)))

    def footprint(t):
        # Pass 1: X tile (x2 buffers) + W (grid-invariant, still counted with 2
        # buffers, see Buffered(1) TODO) + bf16 Y out tile (x2) + tiny stats.
        p1 = 2 * t * kpad * 2 + 2 * kpad * cpad * 2 + 2 * t * cpad * 2 + 2 * 2 * cpad * 4
        # Pass 2: bf16 Y tile (x2) + f32 out tile (x2) + scale/shift vectors.
        p2 = 2 * t * cpad * 2 + 2 * t * cpad * 4 + 4 * cpad * 4
        return max(p1, p2)

    while tm > 128 and footprint(tm) > budget:
        tm = _round_up(tm // 2, _SUBLANE)

    limit = int(footprint(tm) * 1.3) + (2 << 20)
    limit = max(16 << 20, min(limit, int(phys * 0.75)))
    return tm, limit


# ---------------- Pass 1: conv matmul -> bf16 Y tile + Welford partials ------
def _make_conv_stats_kernel(m_rows, tile_rows, m_padded):
    exact = (m_padded == m_rows)  # no padded rows -> skip the row mask

    def kernel(x_ref, w_ref, y_ref, stats_ref):
        # x_ref: [TM, Kpad] bf16 (streamed); w_ref: [Kpad, Cpad] bf16 (resident)
        # y_ref: [TM, Cpad] bf16 written once, re-read by pass 2 (no 2nd matmul)
        # stats_ref: [1, 2, Cpad] f32 -> (row sum, centered sum-of-squares)
        y32 = jnp.dot(x_ref[...], w_ref[...], preferred_element_type=jnp.float32)
        y_bf = y32.astype(jnp.bfloat16)
        y_ref[...] = y_bf
        # Stats are taken from the bf16-rounded values so normalization is
        # exactly self-consistent with what pass 2 reads back.
        y = y_bf.astype(jnp.float32)
        s1 = jnp.sum(y, axis=0, keepdims=True)            # zero-padded rows add 0
        if exact:
            mu = s1 * (1.0 / tile_rows)
            d = y - mu
        else:
            i = pl.program_id(0)
            cnt = jnp.minimum(tile_rows, m_rows - i * tile_rows).astype(jnp.float32)
            mu = s1 / cnt
            row = jax.lax.broadcasted_iota(jnp.int32, (tile_rows, 1), 0) + i * tile_rows
            d = (y - mu) * (row < m_rows).astype(jnp.float32)
        m2 = jnp.sum(d * d, axis=0, keepdims=True)         # centered -> no cancellation
        stats_ref[...] = jnp.concatenate([s1, m2], axis=0)[None]

    return kernel


# ---------------- Pass 2: fused BN affine -> GELU (no matmul) ----------------
def _bn_gelu_erf_kernel(y_ref, scale_ref, shift_ref, o_ref):
    """Exact erf GELU — matches torch.nn.GELU() default."""
    y = y_ref[...].astype(jnp.float32) * scale_ref[...] + shift_ref[...]
    o_ref[...] = 0.5 * y * (1.0 + jax.lax.erf(y * _INV_SQRT2))


def _bn_gelu_tanh_kernel(y_ref, scale_ref, shift_ref, o_ref):
    """Tanh-approximate GELU — moves the transcendental onto the idle EUP slot."""
    y = y_ref[...].astype(jnp.float32) * scale_ref[...] + shift_ref[...]
    inner = _SQRT_2_OVER_PI * (y + 0.044715 * (y * y * y))
    o_ref[...] = 0.5 * y * (1.0 + jnp.tanh(inner))


def vae_unit_encoder(x, weight, bias, gamma, beta, *, tm=2048, approx_gelu=False):
    """x: [N, Cin, H, W] float32 (NCHW). Returns [N, Cout, Ho, Wo] float32."""
    N, Cin, H, W = x.shape
    Cout = weight.shape[0]
    K, S, P = 4, 2, 1
    Ho = (H + 2 * P - K) // S + 1
    Wo = (W + 2 * P - K) // S + 1
    M = N * Ho * Wo
    Kdim = Cin * K * K

    # Lane-/MXU-friendly padded sizes (zero-padding the contraction beyond the
    # 128-lane granularity only wastes MXU cycles, so keep 128 multiples).
    Cpad = _round_up(Cout, _LANE)
    Kpad = _round_up(Kdim, _LANE)
    TM, vmem_limit = _plan_tiles(M, Kpad, Cpad, tm)
    Mpad = _round_up(M, TM)
    n_tiles = Mpad // TM

    # ---- glue: im2col in plain JAX, in bf16 from the start (halves the bytes
    # of the materialized matrix; the MXU feed is bf16 anyway). ----------------
    # TODO(synk): replace with in-kernel streaming of shifted NHWC windows.
    xb = x.astype(jnp.bfloat16)
    xp = jnp.pad(xb, ((0, 0), (0, 0), (P, P), (P, P)))
    patches = []
    for kh in range(K):
        for kw in range(K):
            patches.append(xp[:, :, kh:kh + S * Ho:S, kw:kw + S * Wo:S])
    p = jnp.stack(patches, axis=0).reshape(K, K, N, Cin, Ho, Wo)
    p = p.transpose(2, 4, 5, 3, 0, 1)                      # [N, Ho, Wo, Cin, K, K]
    Xmat = p.reshape(M, Kdim)
    Xmat = jnp.pad(Xmat, ((0, Mpad - M), (0, Kpad - Kdim)))

    Wmat = weight.astype(jnp.bfloat16).reshape(Cout, Kdim).T   # [Kdim, Cout]
    Wmat = jnp.pad(Wmat, ((0, Kpad - Kdim), (0, Cpad - Cout)))

    common_params = pltpu.CompilerParams(
        dimension_semantics=("parallel",),
        vmem_limit_bytes=vmem_limit,
    )

    # ---------------- Pass 1: Y = X @ W (once) + per-tile statistics ----------
    y_flat, stats = pl.pallas_call(
        _make_conv_stats_kernel(M, TM, Mpad),
        out_shape=(
            jax.ShapeDtypeStruct((Mpad, Cpad), jnp.bfloat16),       # conv output Y
            jax.ShapeDtypeStruct((n_tiles, 2, Cpad), jnp.float32),  # stats partials
        ),
        grid=(n_tiles,),
        in_specs=[
            pl.BlockSpec((TM, Kpad), lambda i: (i, 0)),      # X tile (streamed)
            pl.BlockSpec((Kpad, Cpad), lambda i: (0, 0)),    # W (grid-invariant)
        ],
        out_specs=(
            pl.BlockSpec((TM, Cpad), lambda i: (i, 0)),      # lane-dense Y
            pl.BlockSpec((1, 2, Cpad), lambda i: (i, 0, 0)),
        ),
        compiler_params=common_params,
        cost_estimate=pl.CostEstimate(
            flops=2 * Mpad * Kpad * Cpad + 6 * Mpad * Cpad,
            transcendentals=0,
            bytes_accessed=(Mpad * Kpad * 2 + Kpad * Cpad * 2
                            + Mpad * Cpad * 2 + n_tiles * 2 * Cpad * 4),
        ),
    )(Xmat, Wmat)

    # ---- tiny JAX combine: Chan's parallel-variance merge -> scale/shift -----
    counts = jnp.clip(M - jnp.arange(n_tiles) * TM, 1, TM).astype(jnp.float32)
    s1 = stats[:, 0, :]                                    # [n_tiles, Cpad]
    m2 = stats[:, 1, :]
    mean = jnp.sum(s1, axis=0) / M                         # conv-output batch mean
    tile_mean = s1 / counts[:, None]
    var = (jnp.sum(m2, axis=0)
           + jnp.sum(counts[:, None] * (tile_mean - mean[None, :]) ** 2, axis=0)) / M

    gamma_p = jnp.pad(gamma.astype(jnp.float32), (0, Cpad - Cout), constant_values=1.0)
    beta_p = jnp.pad(beta.astype(jnp.float32), (0, Cpad - Cout))
    # Padded channels: var == 0 -> scale = rsqrt(eps) (large but finite), and
    # mean == 0, beta == 0 -> shift == 0, so padded lanes stay exactly 0 (no
    # NaNs) and are sliced off below.
    scale = gamma_p * jax.lax.rsqrt(var + _BN_EPS)
    # Training-mode BN subtracts the batch mean, so the conv bias cancels
    # exactly: (conv + b - (mean_conv + b)) * scale + beta = conv*scale + shift.
    shift = beta_p - mean * scale
    del bias  # cancels analytically under training-mode batch norm
    scale2 = scale.reshape(1, Cpad)
    shift2 = shift.reshape(1, Cpad)

    # ---------------- Pass 2: elementwise BN affine + GELU over Y -------------
    gelu_kernel = _bn_gelu_tanh_kernel if approx_gelu else _bn_gelu_erf_kernel
    out = pl.pallas_call(
        gelu_kernel,
        out_shape=jax.ShapeDtypeStruct((Mpad, Cpad), jnp.float32),
        grid=(n_tiles,),
        in_specs=[
            pl.BlockSpec((TM, Cpad), lambda i: (i, 0)),      # Y tile (streamed)
            pl.BlockSpec((1, Cpad), lambda i: (0, 0)),       # scale (grid-invariant)
            pl.BlockSpec((1, Cpad), lambda i: (0, 0)),       # shift (grid-invariant)
        ],
        out_specs=pl.BlockSpec((TM, Cpad), lambda i: (i, 0)),  # lane-dense output
        compiler_params=common_params,
        cost_estimate=pl.CostEstimate(
            flops=10 * Mpad * Cpad,
            transcendentals=Mpad * Cpad,
            bytes_accessed=Mpad * Cpad * 2 + Mpad * Cpad * 4 + 2 * Cpad * 4,
        ),
    )(y_flat, scale2, shift2)

    out = out[:M, :Cout]
    # Back to NCHW to match the PyTorch module's output layout.
    # TODO(synk): keep NHWC (and optionally bf16) and fold this transpose into
    # the consumer in a real pipeline to avoid the extra HBM round trip.
    return out.reshape(N, Ho, Wo, Cout).transpose(0, 3, 1, 2)


def _reference(x, weight, bias, gamma, beta):
    """Pure-JAX f32 reference mirroring the PyTorch forward (training-mode BN)."""
    y = jax.lax.conv_general_dilated(
        x, weight, window_strides=(2, 2), padding=[(1, 1), (1, 1)],
        dimension_numbers=('NCHW', 'OIHW', 'NCHW'))
    y = y + bias.reshape(1, -1, 1, 1)
    mean = jnp.mean(y, axis=(0, 2, 3), keepdims=True)
    var = jnp.mean((y - mean) ** 2, axis=(0, 2, 3), keepdims=True)
    y = (y - mean) * jax.lax.rsqrt(var + _BN_EPS)
    y = y * gamma.reshape(1, -1, 1, 1) + beta.reshape(1, -1, 1, 1)
    return 0.5 * y * (1.0 + jax.lax.erf(y * _INV_SQRT2))


if __name__ == "__main__":
    key = jax.random.PRNGKey(0)
    k1, k2, k3, k4, k5 = jax.random.split(key, 5)

    N, Cin, Cout, H, W = 2, 4, 8, 16, 16
    x = jax.random.normal(k1, (N, Cin, H, W), jnp.float32)
    weight = 0.1 * jax.random.normal(k2, (Cout, Cin, 4, 4), jnp.float32)
    bias = 0.1 * jax.random.normal(k3, (Cout,), jnp.float32)
    gamma = 1.0 + 0.1 * jax.random.normal(k4, (Cout,), jnp.float32)
    beta = 0.1 * jax.random.normal(k5, (Cout,), jnp.float32)

    ref = _reference(x, weight, bias, gamma, beta)

    # Default path: exact erf GELU, auto-sized tiles (M divides evenly here).
    fwd = jax.jit(vae_unit_encoder)
    out = jax.block_until_ready(fwd(x, weight, bias, gamma, beta))
    assert out.shape == (N, Cout, H // 2, W // 2), out.shape
    # Tolerance relaxed vs the f32 reference: MXU inputs and the stored Y
    # intermediate are bf16 (with f32 accumulation / f32 statistics).
    err = float(jnp.max(jnp.abs(out - ref)))
    assert jnp.allclose(out, ref, rtol=1e-2, atol=1e-2), err

    # Second configuration: tanh-approximate GELU epilogue and a tile height
    # that does not divide M (exercises the masked per-tile statistics path).
    fwd2 = jax.jit(functools.partial(vae_unit_encoder, tm=96, approx_gelu=True))
    out2 = jax.block_until_ready(fwd2(x, weight, bias, gamma, beta))
    err2 = float(jnp.max(jnp.abs(out2 - ref)))
    assert jnp.allclose(out2, ref, rtol=2e-2, atol=2e-2), err2

    print("KERNEL_OK")
</pallas_src>

<mosaic_0001>
module attributes {stable_mosaic.version = 11 : i64} {
  func.func @_bn_gelu_erf_kernel(%arg0: i32, %arg1: memref<128x128xbf16, #tpu.memory_space<vmem>>, %arg2: memref<1x128xf32, #tpu.memory_space<vmem>>, %arg3: memref<1x128xf32, #tpu.memory_space<vmem>>, %arg4: memref<128x128xf32, #tpu.memory_space<vmem>>) attributes {dimension_semantics = [#tpu.dimension_semantics<parallel>], iteration_bounds = array<i64: 1>, scalar_prefetch = 0 : i64, scratch_operands = 0 : i64, tpu.core_type = #tpu.core_type<tc>, window_params = [{transform_indices = @transform_0, window_bounds = array<i64: 128, 128>}, {pipeline_mode = #tpu.pipeline_mode<synchronous>, transform_indices = @transform_1, window_bounds = array<i64: 1, 128>}, {pipeline_mode = #tpu.pipeline_mode<synchronous>, transform_indices = @transform_2, window_bounds = array<i64: 1, 128>}, {transform_indices = @transform_3, window_bounds = array<i64: 128, 128>}]} {
    %c0 = arith.constant 0 : index
    %c0_0 = arith.constant 0 : index
    %0 = vector.load %arg1[%c0, %c0_0] : memref<128x128xbf16, #tpu.memory_space<vmem>>, vector<128x128xbf16>
    %1 = arith.extf %0 : vector<128x128xbf16> to vector<128x128xf32>
    %c0_1 = arith.constant 0 : index
    %c0_2 = arith.constant 0 : index
    %2 = vector.load %arg2[%c0_1, %c0_2] : memref<1x128xf32, #tpu.memory_space<vmem>>, vector<1x128xf32>
    %3 = vector.broadcast %2 : vector<1x128xf32> to vector<128x128xf32>
    %4 = arith.mulf %1, %3 : vector<128x128xf32>
    %c0_3 = arith.constant 0 : index
    %c0_4 = arith.constant 0 : index
    %5 = vector.load %arg3[%c0_3, %c0_4] : memref<1x128xf32, #tpu.memory_space<vmem>>, vector<1x128xf32>
    %6 = vector.broadcast %5 : vector<1x128xf32> to vector<128x128xf32>
    %7 = arith.addf %4, %6 : vector<128x128xf32>
    %cst = arith.constant 5.000000e-01 : f32
    %8 = vector.broadcast %cst : f32 to vector<128x128xf32>
    %9 = arith.mulf %8, %7 : vector<128x128xf32>
    %cst_5 = arith.constant 0.707106769 : f32
    %10 = vector.broadcast %cst_5 : f32 to vector<128x128xf32>
    %11 = arith.mulf %7, %10 : vector<128x128xf32>
    %12 = math.erf %11 : vector<128x128xf32>
    %cst_6 = arith.constant 1.000000e+00 : f32
    %13 = vector.broadcast %cst_6 : f32 to vector<128x128xf32>
    %14 = arith.addf %13, %12 : vector<128x128xf32>
    %15 = arith.mulf %9, %14 : vector<128x128xf32>
    %c0_7 = arith.constant 0 : index
    %c0_8 = arith.constant 0 : index
    %16 = vector.load %arg4[%c0_7, %c0_8] : memref<128x128xf32, #tpu.memory_space<vmem>>, vector<128x128xf32>
    tpu.vector_store %arg4[%c0_7, %c0_8], %15 {strides = array<i32>} : memref<128x128xf32, #tpu.memory_space<vmem>>, vector<128x128xf32>,
    return
  }
  func.func @transform_0(%arg0: i32) -> (i32, i32) {
    %c0_i32 = arith.constant 0 : i32
    %c0_i32_0 = arith.constant 0 : i32
    return %arg0, %c0_i32 : i32, i32
  }
  func.func @transform_1(%arg0: i32) -> (i32, i32) {
    %c0_i32 = arith.constant 0 : i32
    %c0_i32_0 = arith.constant 0 : i32
    %c0_i32_1 = arith.constant 0 : i32
    return %c0_i32, %c0_i32_0 : i32, i32
  }
  func.func @transform_2(%arg0: i32) -> (i32, i32) {
    %c0_i32 = arith.constant 0 : i32
    %c0_i32_0 = arith.constant 0 : i32
    %c0_i32_1 = arith.constant 0 : i32
    return %c0_i32, %c0_i32_0 : i32, i32
  }
  func.func @transform_3(%arg0: i32) -> (i32, i32) {
    %c0_i32 = arith.constant 0 : i32
    %c0_i32_0 = arith.constant 0 : i32
    return %arg0, %c0_i32 : i32, i32
  }
}

module attributes {stable_mosaic.version = 11 : i64} {
  func.func @kernel(%arg0: i32, %arg1: memref<128x128xbf16, #tpu.memory_space<vmem>>, %arg2: memref<128x128xbf16, #tpu.memory_space<vmem>>, %arg3: memref<128x128xbf16, #tpu.memory_space<vmem>>, %arg4: memref<1x2x128xf32, #tpu.memory_space<vmem>>) attributes {dimension_semantics = [#tpu.dimension_semantics<parallel>], iteration_bounds = array<i64: 1>, scalar_prefetch = 0 : i64, scratch_operands = 0 : i64, tpu.core_type = #tpu.core_type<tc>, window_params = [{transform_indices = @transform_0, window_bounds = array<i64: 128, 128>}, {pipeline_mode = #tpu.pipeline_mode<synchronous>, transform_indices = @transform_1, window_bounds = array<i64: 128, 128>}, {transform_indices = @transform_2, window_bounds = array<i64: 128, 128>}, {transform_indices = @transform_3, window_bounds = array<i64: 1, 2, 128>}]} {
    %c0 = arith.constant 0 : index
    %c0_0 = arith.constant 0 : index
    %0 = vector.load %arg1[%c0, %c0_0] : memref<128x128xbf16, #tpu.memory_space<vmem>>, vector<128x128xbf16>
    %c0_1 = arith.constant 0 : index
    %c0_2 = arith.constant 0 : index
    %1 = vector.load %arg2[%c0_1, %c0_2] : memref<128x128xbf16, #tpu.memory_space<vmem>>, vector<128x128xbf16>
    %cst = arith.constant dense<0.000000e+00> : vector<128x128xf32>
    %2 = tpu.matmul %0, %1, %cst {dimension_numbers = #tpu.dot_dimension_numbers<[1], [0], [0], [1], [0, 0, 1, 1], [], []>} : vector<128x128xbf16>, vector<128x128xbf16>, vector<128x128xf32> -> vector<128x128xf32>
    %3 = arith.truncf %2 : vector<128x128xf32> to vector<128x128xbf16>
    %c0_3 = arith.constant 0 : index
    %c0_4 = arith.constant 0 : index
    %4 = vector.load %arg3[%c0_3, %c0_4] : memref<128x128xbf16, #tpu.memory_space<vmem>>, vector<128x128xbf16>
    tpu.vector_store %arg3[%c0_3, %c0_4], %3 {strides = array<i32>} : memref<128x128xbf16, #tpu.memory_space<vmem>>, vector<128x128xbf16>,
    %5 = arith.extf %3 : vector<128x128xbf16> to vector<128x128xf32>
    %cst_5 = arith.constant dense<0.000000e+00> : vector<128xf32>
    %6 = vector.multi_reduction <add>, %5, %cst_5 [0] : vector<128x128xf32> to vector<128xf32>
    %7 = vector.shape_cast %6 : vector<128xf32> to vector<1x128xf32>
    %cst_6 = arith.constant 7.812500e-03 : f32
    %8 = vector.broadcast %cst_6 : f32 to vector<1x128xf32>
    %9 = arith.mulf %7, %8 : vector<1x128xf32>
    %10 = vector.broadcast %9 : vector<1x128xf32> to vector<128x128xf32>
    %11 = arith.subf %5, %10 : vector<128x128xf32>
    %12 = arith.mulf %11, %11 : vector<128x128xf32>
    %cst_7 = arith.constant dense<0.000000e+00> : vector<128xf32>
    %13 = vector.multi_reduction <add>, %12, %cst_7 [0] : vector<128x128xf32> to vector<128xf32>
    %14 = vector.shape_cast %13 : vector<128xf32> to vector<1x128xf32>
    %15 = tpu.concatenate %7, %14 in 0 : vector<1x128xf32>, vector<1x128xf32> -> vector<2x128xf32>
    %16 = vector.shape_cast %15 : vector<2x128xf32> to vector<1x2x128xf32>
    %c0_8 = arith.constant 0 : index
    %c0_9 = arith.constant 0 : index
    %c0_10 = arith.constant 0 : index
    %17 = vector.load %arg4[%c0_8, %c0_9, %c0_10] : memref<1x2x128xf32, #tpu.memory_space<vmem>>, vector<1x2x128xf32>
    tpu.vector_store %arg4[%c0_8, %c0_9, %c0_10], %16 {strides = array<i32>} : memref<1x2x128xf32, #tpu.memory_space<vmem>>, vector<1x2x128xf32>,
    return
  }
  func.func @transform_0(%arg0: i32) -> (i32, i32) {
    %c0_i32 = arith.constant 0 : i32
    %c0_i32_0 = arith.constant 0 : i32
    return %arg0, %c0_i32 : i32, i32
  }
  func.func @transform_1(%arg0: i32) -> (i32, i32) {
    %c0_i32 = arith.constant 0 : i32
    %c0_i32_0 = arith.constant 0 : i32
    %c0_i32_1 = arith.constant 0 : i32
    return %c0_i32, %c0_i32_0 : i32, i32
  }
  func.func @transform_2(%arg0: i32) -> (i32, i32) {
    %c0_i32 = arith.constant 0 : i32
    %c0_i32_0 = arith.constant 0 : i32
    return %arg0, %c0_i32 : i32, i32
  }
  func.func @transform_3(%arg0: i32) -> (i32, i32, i32) {
    %c0_i32 = arith.constant 0 : i32
    %c0_i32_0 = arith.constant 0 : i32
    %c0_i32_1 = arith.constant 0 : i32
    return %arg0, %c0_i32, %c0_i32_0 : i32, i32, i32
  }
}

</mosaic_0001>

<llo_original>
// kernel: vae_unit_encoder.3
$region0: #{vae_unit_encoder.3}
  #allocation0 [shape = 'u32[]', space=smem, size = 0x4, offset = 0x4, fixed_abs, tag = 'smem constant byte address 0x4 - core index']
  #allocation1 [shape = 'u32[72,128]{1,0:T(1,128)}', space=vmem, size = 0x9000, scoped, tag = 'internal scratch']
  %s0 = inlined_call_operand.vmem [shape: bf16[128,128], index: 0, kind: input, shape index: {}]
  %s1 = inlined_call_operand.vmem [shape: f32[1,128], index: 1, kind: input, shape index: {}]
  %s2 = inlined_call_operand.vmem [shape: f32[1,128], index: 2, kind: input, shape index: {}]
  %s3 = inlined_call_operand.vmem [shape: f32[128,128], index: 3, kind: output, shape index: {}]
  %s4 = sld [smem:[#allocation0]]
  $region22: #{vae_unit_encoder.3} parent=0
    _
  %s6 = ssub.s32 1, %s4
  %s7 = scalar_select 0, %s6, %s4
  // Predicated region
  $region2: #{vae_unit_encoder.3} parent=0 // pred_check
    _
  $region3: #{vae_unit_encoder.3} parent=0 // pred_check_branch
    %9 = sbr.rel (0) target = $region5
  $region4: #{vae_unit_encoder.3} parent=0 // pred_region
    _
  $region5: #{vae_unit_encoder.3} parent=0 // pred_fallthru
    _
  // Predicated region
  $region6: #{vae_unit_encoder.3} parent=0 // pred_check
    _
  $region7: #{vae_unit_encoder.3} parent=0 // pred_check_branch
    %11 = sbr.rel (0) target = $region9
  $region8: #{vae_unit_encoder.3} parent=0 // pred_region
    _
  $region9: #{vae_unit_encoder.3} parent=0 // pred_fallthru
    _
  // Predicated region
  $region10: #{vae_unit_encoder.3} parent=0 // pred_check
    _
  $region11: #{vae_unit_encoder.3} parent=0 // pred_check_branch
    %13 = sbr.rel (0) target = $region13
  $region12: #{vae_unit_encoder.3} parent=0 // pred_region
    _
  $region13: #{vae_unit_encoder.3} parent=0 // pred_fallthru
    _
  %v14 = vld [vmem:[%s0] sm:$0xf]
  %v15 = vld [vmem:[%s0 + $0x4] sm:$0xf]
  %v16 = vld [vmem:[%s0 + $0x8] sm:$0xf]
  %v17 = vld [vmem:[%s0 + $0xc] sm:$0xf]
  %v18 = vld [vmem:[%s0 + $0x10] sm:$0xf]
  %v19 = vld [vmem:[%s0 + $0x14] sm:$0xf]
  %v20 = vld [vmem:[%s0 + $0x18] sm:$0xf]
  %v21 = vld [vmem:[%s0 + $0x1c] sm:$0xf]
  %v22 = vld [vmem:[%s0 + $0x20] sm:$0xf]
  %v23 = vld [vmem:[%s0 + $0x24] sm:$0xf]
  %v24 = vld [vmem:[%s0 + $0x28] sm:$0xf]
  %v25 = vld [vmem:[%s0 + $0x2c] sm:$0xf]
  %v26 = vld [vmem:[%s0 + $0x30] sm:$0xf]
  %v27 = vld [vmem:[%s0 + $0x34] sm:$0xf]
  %v28 = vld [vmem:[%s0 + $0x38] sm:$0xf]
  %v29 = vld [vmem:[%s0 + $0x3c] sm:$0xf]
  %v30 = vunpack.c.l.bf16 %v14
  %v31 = vunpack.c.l.bf16 %v15
  %v32 = vunpack.c.l.bf16 %v16
  %v33 = vunpack.c.l.bf16 %v17
  %v34 = vunpack.c.l.bf16 %v18
  %v35 = vunpack.c.l.bf16 %v19
  %v36 = vunpack.c.l.bf16 %v20
  %v37 = vunpack.c.l.bf16 %v21
  %v38 = vunpack.c.l.bf16 %v22
  %v39 = vunpack.c.l.bf16 %v23
  %v40 = vunpack.c.l.bf16 %v24
  %v41 = vunpack.c.l.bf16 %v25
  %v42 = vunpack.c.l.bf16 %v26
  %v43 = vunpack.c.l.bf16 %v27
  %v44 = vunpack.c.l.bf16 %v28
  %v45 = vunpack.c.l.bf16 %v29
  %v46 = vld [vmem:[%s1] sm:$0x1]
  %v48 = vperm.slane %v46, 0
  %v50 = vmul.f32 %v30, %v48
  %v51 = vmul.f32 %v31, %v48
  %v52 = vmul.f32 %v32, %v48
  %v53 = vmul.f32 %v33, %v48
  %v54 = vmul.f32 %v34, %v48
  %v55 = vmul.f32 %v35, %v48
  %v56 = vmul.f32 %v36, %v48
  %v57 = vmul.f32 %v37, %v48
  %v58 = vmul.f32 %v38, %v48
  %v59 = vmul.f32 %v39, %v48
  %v60 = vmul.f32 %v40, %v48
  %v61 = vmul.f32 %v41, %v48
  %v62 = vmul.f32 %v42, %v48
  %v63 = vmul.f32 %v43, %v48
  %v64 = vmul.f32 %v44, %v48
  %v65 = vmul.f32 %v45, %v48
  %v66 = vld [vmem:[%s2] sm:$0x1]
  %v68 = vperm.slane %v66, 0
  %v70 = vadd.f32 %v50, %v68
  %v71 = vadd.f32 %v51, %v68
  %v72 = vadd.f32 %v52, %v68
  %v73 = vadd.f32 %v53, %v68
  %v74 = vadd.f32 %v54, %v68
  %v75 = vadd.f32 %v55, %v68
  %v76 = vadd.f32 %v56, %v68
  %v77 = vadd.f32 %v57, %v68
  %v78 = vadd.f32 %v58, %v68
  %v79 = vadd.f32 %v59, %v68
  %v80 = vadd.f32 %v60, %v68
  %v81 = vadd.f32 %v61, %v68
  %v82 = vadd.f32 %v62, %v68
  %v83 = vadd.f32 %v63, %v68
  %v84 = vadd.f32 %v64, %v68
  %v85 = vadd.f32 %v65, %v68
  %v86 = vmul.f32 %v70, 0.5
  %v87 = vmul.f32 %v71, 0.5
  %v88 = vmul.f32 %v72, 0.5
  %v89 = vmul.f32 %v73, 0.5
  %v90 = vmul.f32 %v74, 0.5
  %v91 = vmul.f32 %v75, 0.5
  %v92 = vmul.f32 %v76, 0.5
  %v93 = vmul.f32 %v77, 0.5
  %v94 = vmul.f32 %v78, 0.5
  %v95 = vmul.f32 %v79, 0.5
  %v96 = vmul.f32 %v80, 0.5
  %v97 = vmul.f32 %v81, 0.5
  %v98 = vmul.f32 %v82, 0.5
  %v99 = vmul.f32 %v83, 0.5
  %v100 = vmul.f32 %v84, 0.5
  %v101 = vmul.f32 %v85, 0.5
  %v102 = vmul.f32 %v70, 0.70710677
  %v103 = vmul.f32 %v71, 0.70710677
  %v104 = vmul.f32 %v72, 0.70710677
  %v105 = vmul.f32 %v73, 0.70710677
  %v106 = vmul.f32 %v74, 0.70710677
  %v107 = vmul.f32 %v75, 0.70710677
  %v108 = vmul.f32 %v76, 0.70710677
  %v109 = vmul.f32 %v77, 0.70710677
  %v110 = vmul.f32 %v78, 0.70710677
  %v111 = vmul.f32 %v79, 0.70710677
  %v112 = vmul.f32 %v80, 0.70710677
  %v113 = vmul.f32 %v81, 0.70710677
  %v114 = vmul.f32 %v82, 0.70710677
  %v115 = vmul.f32 %v83, 0.70710677
  %v116 = vmul.f32 %v84, 0.70710677
  %v117 = vmul.f32 %v85, 0.70710677
  %v118 = vmul.f32 %v102, %v102
  %v119 = vmin.f32 16.0, %v118
  %v120 = vmul.f32 %v119, 2.1237322e-06
  %v121 = vadd.f32 %v120, 0.00028619796
  %v122 = vmul.f32 %v119, %v121
  %v123 = vadd.f32 %v122, 0.0036580483
  %v124 = vmul.f32 %v119, %v123
  %v125 = vadd.f32 %v124, 0.05243302
  %v126 = vmul.f32 %v119, %v125
  %v127 = vadd.f32 %v126, 0.18741608
  %v128 = vmul.f32 %v119, %v127
  %v129 = vadd.f32 %v128, 1.1283791
  %v130 = vmul.f32 %v102, %v129
  %v131 = vmul.f32 %v119, 3.8918573e-05
  %v132 = vadd.f32 %v131, 0.001143296
  %v133 = vmul.f32 %v119, %v132
  %v134 = vadd.f32 %v133, 0.014752088
  %v135 = vmul.f32 %v119, %v134
  %v136 = vadd.f32 %v135, 0.112945676
  %v137 = vmul.f32 %v119, %v136
  %v138 = vadd.f32 %v137, 0.4994258
  %v139 = vmul.f32 %v119, %v138
  %v140 = vadd.f32 %v139, 1.0
  %v141 = vrcp.pop %v140
  %v142 = vmul.f32 %v140, %v141
  %v143 = vsub.f32 1.0, %v142
  %v144 = vmul.f32 %v141, %v143
  %v145 = vadd.f32 %v141, %v144
  %vm146 = vweird.f32 %v140
  %vm147 = vweird.f32 %v141
  %vm148 = vmor %vm146, %vm147
  %v149 = vsel %vm148, %v141, %v145
  %v150 = vand.u32 2147483647, %v140
  %vm151 = vcmp.eq.f32.partialorder %v150, 8.507059e+37
  %v152 = vand.u32 %v140, 2147483648
  %v153 = vor.u32 1.1754944e-38, %v152
  %v154 = vsel %vm151, %v153, %v149
  %v155 = vmul.f32 %v130, %v154
  %v156 = vmin.f32 %v155, 1.0
  %v157 = vmax.f32 %v156, -1.0
  %v158 = vmul.f32 %v103, %v103
  %v159 = vmin.f32 16.0, %v158
  %v160 = vmul.f32 %v159, 2.1237322e-06
  %v161 = vadd.f32 %v160, 0.00028619796
  %v162 = vmul.f32 %v159, %v161
  %v163 = vadd.f32 %v162, 0.0036580483
  %v164 = vmul.f32 %v159, %v163
  %v165 = vadd.f32 %v164, 0.05243302
  %v166 = vmul.f32 %v159, %v165
  %v167 = vadd.f32 %v166, 0.18741608
  %v168 = vmul.f32 %v159, %v167
  %v169 = vadd.f32 %v168, 1.1283791
  %v170 = vmul.f32 %v103, %v169
  %v171 = vmul.f32 %v159, 3.8918573e-05
  %v172 = vadd.f32 %v171, 0.001143296
  %v173 = vmul.f32 %v159, %v172
  %v174 = vadd.f32 %v173, 0.014752088
  %v175 = vmul.f32 %v159, %v174
  %v176 = vadd.f32 %v175, 0.112945676
  %v177 = vmul.f32 %v159, %v176
  %v178 = vadd.f32 %v177, 0.4994258
  %v179 = vmul.f32 %v159, %v178
  %v180 = vadd.f32 %v179, 1.0
  %v181 = vrcp.pop %v180
  %v182 = vmul.f32 %v180, %v181
  %v183 = vsub.f32 1.0, %v182
  %v184 = vmul.f32 %v181, %v183
  %v185 = vadd.f32 %v181, %v184
  %vm186 = vweird.f32 %v180
  %vm187 = vweird.f32 %v181
  %vm188 = vmor %vm186, %vm187
  %v189 = vsel %vm188, %v181, %v185
  %v190 = vand.u32 2147483647, %v180
  %vm191 = vcmp.eq.f32.partialorder %v190, 8.507059e+37
  %v192 = vand.u32 %v180, 2147483648
  %v193 = vor.u32 1.1754944e-38, %v192
  %v194 = vsel %vm191, %v193, %v189
  %v195 = vmul.f32 %v170, %v194
  %v196 = vmin.f32 %v195, 1.0
  %v197 = vmax.f32 %v196, -1.0
  %v198 = vmul.f32 %v104, %v104
  %v199 = vmin.f32 16.0, %v198
  %v200 = vmul.f32 %v199, 2.1237322e-06
  %v201 = vadd.f32 %v200, 0.00028619796
  %v202 = vmul.f32 %v199, %v201
  %v203 = vadd.f32 %v202, 0.0036580483
  %v204 = vmul.f32 %v199, %v203
  %v205 = vadd.f32 %v204, 0.05243302
  %v206 = vmul.f32 %v199, %v205
  %v207 = vadd.f32 %v206, 0.18741608
  %v208 = vmul.f32 %v199, %v207
  %v209 = vadd.f32 %v208, 1.1283791
  %v210 = vmul.f32 %v104, %v209
  %v211 = vmul.f32 %v199, 3.8918573e-05
  %v212 = vadd.f32 %v211, 0.001143296
  %v213 = vmul.f32 %v199, %v212
  %v214 = vadd.f32 %v213, 0.014752088
  %v215 = vmul.f32 %v199, %v214
  %v216 = vadd.f32 %v215, 0.112945676
  %v217 = vmul.f32 %v199, %v216
  %v218 = vadd.f32 %v217, 0.4994258
  %v219 = vmul.f32 %v199, %v218
  %v220 = vadd.f32 %v219, 1.0
  %v221 = vrcp.pop %v220
  %v222 = vmul.f32 %v220, %v221
  %v223 = vsub.f32 1.0, %v222
  %v224 = vmul.f32 %v221, %v223
  %v225 = vadd.f32 %v221, %v224
  %vm226 = vweird.f32 %v220
  %vm227 = vweird.f32 %v221
  %vm228 = vmor %vm226, %vm227
  %v229 = vsel %vm228, %v221, %v225
  %v230 = vand.u32 2147483647, %v220
  %vm231 = vcmp.eq.f32.partialorder %v230, 8.507059e+37
  %v232 = vand.u32 %v220, 2147483648
  %v233 = vor.u32 1.1754944e-38, %v232
  %v234 = vsel %vm231, %v233, %v229
  %v235 = vmul.f32 %v210, %v234
  %v236 = vmin.f32 %v235, 1.0
  %v237 = vmax.f32 %v236, -1.0
  %v238 = vmul.f32 %v105, %v105
  %v239 = vmin.f32 16.0, %v238
  %v240 = vmul.f32 %v239, 2.1237322e-06
  %v241 = vadd.f32 %v240, 0.00028619796
  %v242 = vmul.f32 %v239, %v241
  %v243 = vadd.f32 %v242, 0.0036580483
  %v244 = vmul.f32 %v239, %v243
  %v245 = vadd.f32 %v244, 0.05243302
  %v246 = vmul.f32 %v239, %v245
  %v247 = vadd.f32 %v246, 0.18741608
  %v248 = vmul.f32 %v239, %v247
  %v249 = vadd.f32 %v248, 1.1283791
  %v250 = vmul.f32 %v105, %v249
  %v251 = vmul.f32 %v239, 3.8918573e-05
  %v252 = vadd.f32 %v251, 0.001143296
  %v253 = vmul.f32 %v239, %v252
  %v254 = vadd.f32 %v253, 0.014752088
  %v255 = vmul.f32 %v239, %v254
  %v256 = vadd.f32 %v255, 0.112945676
  %v257 = vmul.f32 %v239, %v256
  %v258 = vadd.f32 %v257, 0.4994258
  %v259 = vmul.f32 %v239, %v258
  %v260 = vadd.f32 %v259, 1.0
  %v261 = vrcp.pop %v260
  %v262 = vmul.f32 %v260, %v261
  %v263 = vsub.f32 1.0, %v262
  %v264 = vmul.f32 %v261, %v263
  %v265 = vadd.f32 %v261, %v264
  %vm266 = vweird.f32 %v260
  %vm267 = vweird.f32 %v261
  %vm268 = vmor %vm266, %vm267
  %v269 = vsel %vm268, %v261, %v265
  %v270 = vand.u32 2147483647, %v260
  %vm271 = vcmp.eq.f32.partialorder %v270, 8.507059e+37
  %v272 = vand.u32 %v260, 2147483648
  %v273 = vor.u32 1.1754944e-38, %v272
  %v274 = vsel %vm271, %v273, %v269
  %v275 = vmul.f32 %v250, %v274
  %v276 = vmin.f32 %v275, 1.0
  %v277 = vmax.f32 %v276, -1.0
  %v278 = vmul.f32 %v106, %v106
  %v279 = vmin.f32 16.0, %v278
  %v280 = vmul.f32 %v279, 2.1237322e-06
  %v281 = vadd.f32 %v280, 0.00028619796
  %v282 = vmul.f32 %v279, %v281
  %v283 = vadd.f32 %v282, 0.0036580483
  %v284 = vmul.f32 %v279, %v283
  %v285 = vadd.f32 %v284, 0.05243302
  %v286 = vmul.f32 %v279, %v285
  %v287 = vadd.f32 %v286, 0.18741608
  %v288 = vmul.f32 %v279, %v287
  %v289 = vadd.f32 %v288, 1.1283791
  %v290 = vmul.f32 %v106, %v289
  %v291 = vmul.f32 %v279, 3.8918573e-05
  %v292 = vadd.f32 %v291, 0.001143296
  %v293 = vmul.f32 %v279, %v292
  %v294 = vadd.f32 %v293, 0.014752088
  %v295 = vmul.f32 %v279, %v294
  %v296 = vadd.f32 %v295, 0.112945676
  %v297 = vmul.f32 %v279, %v296
  %v298 = vadd.f32 %v297, 0.4994258
  %v299 = vmul.f32 %v279, %v298
  %v300 = vadd.f32 %v299, 1.0
  %v301 = vrcp.pop %v300
  %v302 = vmul.f32 %v300, %v301
  %v303 = vsub.f32 1.0, %v302
  %v304 = vmul.f32 %v301, %v303
  %v305 = vadd.f32 %v301, %v304
  %vm306 = vweird.f32 %v300
  %vm307 = vweird.f32 %v301
  %vm308 = vmor %vm306, %vm307
  %v309 = vsel %vm308, %v301, %v305
  %v310 = vand.u32 2147483647, %v300
  %vm311 = vcmp.eq.f32.partialorder %v310, 8.507059e+37
  %v312 = vand.u32 %v300, 2147483648
  %v313 = vor.u32 1.1754944e-38, %v312
  %v314 = vsel %vm311, %v313, %v309
  %v315 = vmul.f32 %v290, %v314
  %v316 = vmin.f32 %v315, 1.0
  %v317 = vmax.f32 %v316, -1.0
  %v318 = vmul.f32 %v107, %v107
  %v319 = vmin.f32 16.0, %v318
  %v320 = vmul.f32 %v319, 2.1237322e-06
  %v321 = vadd.f32 %v320, 0.00028619796
  %v322 = vmul.f32 %v319, %v321
  %v323 = vadd.f32 %v322, 0.0036580483
  %v324 = vmul.f32 %v319, %v323
  %v325 = vadd.f32 %v324, 0.05243302
  %v326 = vmul.f32 %v319, %v325
  %v327 = vadd.f32 %v326, 0.18741608
  %v328 = vmul.f32 %v319, %v327
  %v329 = vadd.f32 %v328, 1.1283791
  %v330 = vmul.f32 %v107, %v329
  %v331 = vmul.f32 %v319, 3.8918573e-05
  %v332 = vadd.f32 %v331, 0.001143296
  %v333 = vmul.f32 %v319, %v332
  %v334 = vadd.f32 %v333, 0.014752088
  %v335 = vmul.f32 %v319, %v334
  %v336 = vadd.f32 %v335, 0.112945676
  %v337 = vmul.f32 %v319, %v336
  %v338 = vadd.f32 %v337, 0.4994258
  %v339 = vmul.f32 %v319, %v338
  %v340 = vadd.f32 %v339, 1.0
  %v341 = vrcp.pop %v340
  %v342 = vmul.f32 %v340, %v341
  %v343 = vsub.f32 1.0, %v342
  %v344 = vmul.f32 %v341, %v343
  %v345 = vadd.f32 %v341, %v344
  %vm346 = vweird.f32 %v340
  %vm347 = vweird.f32 %v341
  %vm348 = vmor %vm346, %vm347
  %v349 = vsel %vm348, %v341, %v345
  %v350 = vand.u32 2147483647, %v340
  %vm351 = vcmp.eq.f32.partialorder %v350, 8.507059e+37
  %v352 = vand.u32 %v340, 2147483648
  %v353 = vor.u32 1.1754944e-38, %v352
  %v354 = vsel %vm351, %v353, %v349
  %v355 = vmul.f32 %v330, %v354
  %v356 = vmin.f32 %v355, 1.0
  %v357 = vmax.f32 %v356, -1.0
  %v358 = vmul.f32 %v108, %v108
  %v359 = vmin.f32 16.0, %v358
  %v360 = vmul.f32 %v359, 2.1237322e-06
  %v361 = vadd.f32 %v360, 0.00028619796
  %v362 = vmul.f32 %v359, %v361
  %v363 = vadd.f32 %v362, 0.0036580483
  %v364 = vmul.f32 %v359, %v363
  %v365 = vadd.f32 %v364, 0.05243302
  %v366 = vmul.f32 %v359, %v365
  %v367 = vadd.f32 %v366, 0.18741608
  %v368 = vmul.f32 %v359, %v367
  %v369 = vadd.f32 %v368, 1.1283791
  %v370 = vmul.f32 %v108, %v369
  %v371 = vmul.f32 %v359, 3.8918573e-05
  %v372 = vadd.f32 %v371, 0.001143296
  %v373 = vmul.f32 %v359, %v372
  %v374 = vadd.f32 %v373, 0.014752088
  %v375 = vmul.f32 %v359, %v374
  %v376 = vadd.f32 %v375, 0.112945676
  %v377 = vmul.f32 %v359, %v376
  %v378 = vadd.f32 %v377, 0.4994258
  %v379 = vmul.f32 %v359, %v378
  %v380 = vadd.f32 %v379, 1.0
  %v381 = vrcp.pop %v380
  %v382 = vmul.f32 %v380, %v381
  %v383 = vsub.f32 1.0, %v382
  %v384 = vmul.f32 %v381, %v383
  %v385 = vadd.f32 %v381, %v384
  %vm386 = vweird.f32 %v380
  %vm387 = vweird.f32 %v381
  %vm388 = vmor %vm386, %vm387
  %v389 = vsel %vm388, %v381, %v385
  %v390 = vand.u32 2147483647, %v380
  %vm391 = vcmp.eq.f32.partialorder %v390, 8.507059e+37
  %v392 = vand.u32 %v380, 2147483648
  %v393 = vor.u32 1.1754944e-38, %v392
  %v394 = vsel %vm391, %v393, %v389
  %v395 = vmul.f32 %v370, %v394
  %v396 = vmin.f32 %v395, 1.0
  %v397 = vmax.f32 %v396, -1.0
  %v398 = vmul.f32 %v109, %v109
  %v399 = vmin.f32 16.0, %v398
  %v400 = vmul.f32 %v399, 2.1237322e-06
  %v401 = vadd.f32 %v400, 0.00028619796
  %v402 = vmul.f32 %v399, %v401
  %v403 = vadd.f32 %v402, 0.0036580483
  %v404 = vmul.f32 %v399, %v403
  %v405 = vadd.f32 %v404, 0.05243302
  %v406 = vmul.f32 %v399, %v405
  %v407 = vadd.f32 %v406, 0.18741608
  %v408 = vmul.f32 %v399, %v407
  %v409 = vadd.f32 %v408, 1.1283791
  %v410 = vmul.f32 %v109, %v409
  %v411 = vmul.f32 %v399, 3.8918573e-05
  %v412 = vadd.f32 %v411, 0.001143296
  %v413 = vmul.f32 %v399, %v412
  %v414 = vadd.f32 %v413, 0.014752088
  %v415 = vmul.f32 %v399, %v414
  %v416 = vadd.f32 %v415, 0.112945676
  %v417 = vmul.f32 %v399, %v416
  %v418 = vadd.f32 %v417, 0.4994258
  %v419 = vmul.f32 %v399, %v418
  %v420 = vadd.f32 %v419, 1.0
  %v421 = vrcp.pop %v420
  %v422 = vmul.f32 %v420, %v421
  %v423 = vsub.f32 1.0, %v422
  %v424 = vmul.f32 %v421, %v423
  %v425 = vadd.f32 %v421, %v424
  %vm426 = vweird.f32 %v420
  %vm427 = vweird.f32 %v421
  %vm428 = vmor %vm426, %vm427
  %v429 = vsel %vm428, %v421, %v425
  %v430 = vand.u32 2147483647, %v420
  %vm431 = vcmp.eq.f32.partialorder %v430, 8.507059e+37
  %v432 = vand.u32 %v420, 2147483648
  %v433 = vor.u32 1.1754944e-38, %v432
  %v434 = vsel %vm431, %v433, %v429
  %v435 = vmul.f32 %v410, %v434
  %v436 = vmin.f32 %v435, 1.0
  %v437 = vmax.f32 %v436, -1.0
  %v438 = vmul.f32 %v110, %v110
  %v439 = vmin.f32 16.0, %v438
  %v440 = vmul.f32 %v439, 2.1237322e-06
  %v441 = vadd.f32 %v440, 0.00028619796
  %v442 = vmul.f32 %v439, %v441
  %v443 = vadd.f32 %v442, 0.0036580483
  %v444 = vmul.f32 %v439, %v443
  %v445 = vadd.f32 %v444, 0.05243302
  %v446 = vmul.f32 %v439, %v445
  %v447 = vadd.f32 %v446, 0.18741608
  %v448 = vmul.f32 %v439, %v447
  %v449 = vadd.f32 %v448, 1.1283791
  %v450 = vmul.f32 %v110, %v449
  %v451 = vmul.f32 %v439, 3.8918573e-05
  %v452 = vadd.f32 %v451, 0.001143296
  %v453 = vmul.f32 %v439, %v452
  %v454 = vadd.f32 %v453, 0.014752088
  %v455 = vmul.f32 %v439, %v454
  %v456 = vadd.f32 %v455, 0.112945676
  %v457 = vmul.f32 %v439, %v456
  %v458 = vadd.f32 %v457, 0.4994258
  %v459 = vmul.f32 %v439, %v458
  %v460 = vadd.f32 %v459, 1.0
  %v461 = vrcp.pop %v460
  %v462 = vmul.f32 %v460, %v461
  %v463 = vsub.f32 1.0, %v462
  %v464 = vmul.f32 %v461, %v463
  %v465 = vadd.f32 %v461, %v464
  %vm466 = vweird.f32 %v460
  %vm467 = vweird.f32 %v461
  %vm468 = vmor %vm466, %vm467
  %v469 = vsel %vm468, %v461, %v465
  %v470 = vand.u32 2147483647, %v460
  %vm471 = vcmp.eq.f32.partialorder %v470, 8.507059e+37
  %v472 = vand.u32 %v460, 2147483648
  %v473 = vor.u32 1.1754944e-38, %v472
  %v474 = vsel %vm471, %v473, %v469
  %v475 = vmul.f32 %v450, %v474
  %v476 = vmin.f32 %v475, 1.0
  %v477 = vmax.f32 %v476, -1.0
  %v478 = vmul.f32 %v111, %v111
  %v479 = vmin.f32 16.0, %v478
  %v480 = vmul.f32 %v479, 2.1237322e-06
  %v481 = vadd.f32 %v480, 0.00028619796
  %v482 = vmul.f32 %v479, %v481
  %v483 = vadd.f32 %v482, 0.0036580483
  %v484 = vmul.f32 %v479, %v483
  %v485 = vadd.f32 %v484, 0.05243302
  %v486 = vmul.f32 %v479, %v485
  %v487 = vadd.f32 %v486, 0.18741608
  %v488 = vmul.f32 %v479, %v487
  %v489 = vadd.f32 %v488, 1.1283791
  %v490 = vmul.f32 %v111, %v489
  %v491 = vmul.f32 %v479, 3.8918573e-05
  %v492 = vadd.f32 %v491, 0.001143296
  %v493 = vmul.f32 %v479, %v492
  %v494 = vadd.f32 %v493, 0.014752088
  %v495 = vmul.f32 %v479, %v494
  %v496 = vadd.f32 %v495, 0.112945676
  %v497 = vmul.f32 %v479, %v496
  %v498 = vadd.f32 %v497, 0.4994258
  %v499 = vmul.f32 %v479, %v498
  %v500 = vadd.f32 %v499, 1.0
  %v501 = vrcp.pop %v500
  %v502 = vmul.f32 %v500, %v501
  %v503 = vsub.f32 1.0, %v502
  %v504 = vmul.f32 %v501, %v503
  %v505 = vadd.f32 %v501, %v504
  %vm506 = vweird.f32 %v500
  %vm507 = vweird.f32 %v501
  %vm508 = vmor %vm506, %vm507
  %v509 = vsel %vm508, %v501, %v505
  %v510 = vand.u32 2147483647, %v500
  %vm511 = vcmp.eq.f32.partialorder %v510, 8.507059e+37
  %v512 = vand.u32 %v500, 2147483648
  %v513 = vor.u32 1.1754944e-38, %v512
  %v514 = vsel %vm511, %v513, %v509
  %v515 = vmul.f32 %v490, %v514
  %v516 = vmin.f32 %v515, 1.0
  %v517 = vmax.f32 %v516, -1.0
  %v518 = vmul.f32 %v112, %v112
  %v519 = vmin.f32 16.0, %v518
  %v520 = vmul.f32 %v519, 2.1237322e-06
  %v521 = vadd.f32 %v520, 0.00028619796
  %v522 = vmul.f32 %v519, %v521
  %v523 = vadd.f32 %v522, 0.0036580483
  %v524 = vmul.f32 %v519, %v523
  %v525 = vadd.f32 %v524, 0.05243302
  %v526 = vmul.f32 %v519, %v525
  %v527 = vadd.f32 %v526, 0.18741608
  %v528 = vmul.f32 %v519, %v527
  %v529 = vadd.f32 %v528, 1.1283791
  %v530 = vmul.f32 %v112, %v529
  %v531 = vmul.f32 %v519, 3.8918573e-05
  %v532 = vadd.f32 %v531, 0.001143296
  %v533 = vmul.f32 %v519, %v532
  %v534 = vadd.f32 %v533, 0.014752088
  %v535 = vmul.f32 %v519, %v534
  %v536 = vadd.f32 %v535, 0.112945676
  %v537 = vmul.f32 %v519, %v536
  %v538 = vadd.f32 %v537, 0.4994258
  %v539 = vmul.f32 %v519, %v538
  %v540 = vadd.f32 %v539, 1.0
  %v541 = vrcp.pop %v540
  %v542 = vmul.f32 %v540, %v541
  %v543 = vsub.f32 1.0, %v542
  %v544 = vmul.f32 %v541, %v543
  %v545 = vadd.f32 %v541, %v544
  %vm546 = vweird.f32 %v540
  %vm547 = vweird.f32 %v541
  %vm548 = vmor %vm546, %vm547
  %v549 = vsel %vm548, %v541, %v545
  %v550 = vand.u32 2147483647, %v540
  %vm551 = vcmp.eq.f32.partialorder %v550, 8.507059e+37
  %v552 = vand.u32 %v540, 2147483648
  %v553 = vor.u32 1.1754944e-38, %v552
  %v554 = vsel %vm551, %v553, %v549
  %v555 = vmul.f32 %v530, %v554
  %v556 = vmin.f32 %v555, 1.0
  %v557 = vmax.f32 %v556, -1.0
  %v558 = vmul.f32 %v113, %v113
  %v559 = vmin.f32 16.0, %v558
  %v560 = vmul.f32 %v559, 2.1237322e-06
  %v561 = vadd.f32 %v560, 0.00028619796
  %v562 = vmul.f32 %v559, %v561
  %v563 = vadd.f32 %v562, 0.0036580483
  %v564 = vmul.f32 %v559, %v563
  %v565 = vadd.f32 %v564, 0.05243302
  %v566 = vmul.f32 %v559, %v565
  %v567 = vadd.f32 %v566, 0.18741608
  %v568 = vmul.f32 %v559, %v567
  %v569 = vadd.f32 %v568, 1.1283791
  %v570 = vmul.f32 %v113, %v569
  %v571 = vmul.f32 %v559, 3.8918573e-05
  %v572 = vadd.f32 %v571, 0.001143296
  %v573 = vmul.f32 %v559, %v572
  %v574 = vadd.f32 %v573, 0.014752088
  %v575 = vmul.f32 %v559, %v574
  %v576 = vadd.f32 %v575, 0.112945676
  %v577 = vmul.f32 %v559, %v576
  %v578 = vadd.f32 %v577, 0.4994258
  %v579 = vmul.f32 %v559, %v578
  %v580 = vadd.f32 %v579, 1.0
  %v581 = vrcp.pop %v580
  %v582 = vmul.f32 %v580, %v581
  %v583 = vsub.f32 1.0, %v582
  %v584 = vmul.f32 %v581, %v583
  %v585 = vadd.f32 %v581, %v584
  %vm586 = vweird.f32 %v580
  %vm587 = vweird.f32 %v581
  %vm588 = vmor %vm586, %vm587
  %v589 = vsel %vm588, %v581, %v585
  %v590 = vand.u32 2147483647, %v580
  %vm591 = vcmp.eq.f32.partialorder %v590, 8.507059e+37
  %v592 = vand.u32 %v580, 2147483648
  %v593 = vor.u32 1.1754944e-38, %v592
  %v594 = vsel %vm591, %v593, %v589
  %v595 = vmul.f32 %v570, %v594
  %v596 = vmin.f32 %v595, 1.0
  %v597 = vmax.f32 %v596, -1.0
  %v598 = vmul.f32 %v114, %v114
  %v599 = vmin.f32 16.0, %v598
  %v600 = vmul.f32 %v599, 2.1237322e-06
  %v601 = vadd.f32 %v600, 0.00028619796
  %v602 = vmul.f32 %v599, %v601
  %v603 = vadd.f32 %v602, 0.0036580483
  %v604 = vmul.f32 %v599, %v603
  %v605 = vadd.f32 %v604, 0.05243302
  %v606 = vmul.f32 %v599, %v605
  %v607 = vadd.f32 %v606, 0.18741608
  %v608 = vmul.f32 %v599, %v607
  %v609 = vadd.f32 %v608, 1.1283791
  %v610 = vmul.f32 %v114, %v609
  %v611 = vmul.f32 %v599, 3.8918573e-05
  %v612 = vadd.f32 %v611, 0.001143296
  %v613 = vmul.f32 %v599, %v612
  %v614 = vadd.f32 %v613, 0.014752088
  %v615 = vmul.f32 %v599, %v614
  %v616 = vadd.f32 %v615, 0.112945676
  %v617 = vmul.f32 %v599, %v616
  %v618 = vadd.f32 %v617, 0.4994258
  %v619 = vmul.f32 %v599, %v618
  %v620 = vadd.f32 %v619, 1.0
  %v621 = vrcp.pop %v620
  %v622 = vmul.f32 %v620, %v621
  %v623 = vsub.f32 1.0, %v622
  %v624 = vmul.f32 %v621, %v623
  %v625 = vadd.f32 %v621, %v624
  %vm626 = vweird.f32 %v620
  %vm627 = vweird.f32 %v621
  %vm628 = vmor %vm626, %vm627
  %v629 = vsel %vm628, %v621, %v625
  %v630 = vand.u32 2147483647, %v620
  %vm631 = vcmp.eq.f32.partialorder %v630, 8.507059e+37
  %v632 = vand.u32 %v620, 2147483648
  %v633 = vor.u32 1.1754944e-38, %v632
  %v634 = vsel %vm631, %v633, %v629
  %v635 = vmul.f32 %v610, %v634
  %v636 = vmin.f32 %v635, 1.0
  %v637 = vmax.f32 %v636, -1.0
  %v638 = vmul.f32 %v115, %v115
  %v639 = vmin.f32 16.0, %v638
  %v640 = vmul.f32 %v639, 2.1237322e-06
  %v641 = vadd.f32 %v640, 0.00028619796
  %v642 = vmul.f32 %v639, %v641
  %v643 = vadd.f32 %v642, 0.0036580483
  %v644 = vmul.f32 %v639, %v643
  %v645 = vadd.f32 %v644, 0.05243302
  %v646 = vmul.f32 %v639, %v645
  %v647 = vadd.f32 %v646, 0.18741608
  %v648 = vmul.f32 %v639, %v647
  %v649 = vadd.f32 %v648, 1.1283791
  %v650 = vmul.f32 %v115, %v649
  %v651 = vmul.f32 %v639, 3.8918573e-05
  %v652 = vadd.f32 %v651, 0.001143296
  %v653 = vmul.f32 %v639, %v652
  %v654 = vadd.f32 %v653, 0.014752088
  %v655 = vmul.f32 %v639, %v654
  %v656 = vadd.f32 %v655, 0.112945676
  %v657 = vmul.f32 %v639, %v656
  %v658 = vadd.f32 %v657, 0.4994258
  %v659 = vmul.f32 %v639, %v658
  %v660 = vadd.f32 %v659, 1.0
  %v661 = vrcp.pop %v660
  %v662 = vmul.f32 %v660, %v661
  %v663 = vsub.f32 1.0, %v662
  %v664 = vmul.f32 %v661, %v663
  %v665 = vadd.f32 %v661, %v664
  %vm666 = vweird.f32 %v660
  %vm667 = vweird.f32 %v661
  %vm668 = vmor %vm666, %vm667
  %v669 = vsel %vm668, %v661, %v665
  %v670 = vand.u32 2147483647, %v660
  %vm671 = vcmp.eq.f32.partialorder %v670, 8.507059e+37
  %v672 = vand.u32 %v660, 2147483648
  %v673 = vor.u32 1.1754944e-38, %v672
  %v674 = vsel %vm671, %v673, %v669
  %v675 = vmul.f32 %v650, %v674
  %v676 = vmin.f32 %v675, 1.0
  %v677 = vmax.f32 %v676, -1.0
  %v678 = vmul.f32 %v116, %v116
  %v679 = vmin.f32 16.0, %v678
  %v680 = vmul.f32 %v679, 2.1237322e-06
  %v681 = vadd.f32 %v680, 0.00028619796
  %v682 = vmul.f32 %v679, %v681
  %v683 = vadd.f32 %v682, 0.0036580483
  %v684 = vmul.f32 %v679, %v683
  %v685 = vadd.f32 %v684, 0.05243302
  %v686 = vmul.f32 %v679, %v685
  %v687 = vadd.f32 %v686, 0.18741608
  %v688 = vmul.f32 %v679, %v687
  %v689 = vadd.f32 %v688, 1.1283791
  %v690 = vmul.f32 %v116, %v689
  %v691 = vmul.f32 %v679, 3.8918573e-05
  %v692 = vadd.f32 %v691, 0.001143296
  %v693 = vmul.f32 %v679, %v692
  %v694 = vadd.f32 %v693, 0.014752088
  %v695 = vmul.f32 %v679, %v694
  %v696 = vadd.f32 %v695, 0.112945676
  %v697 = vmul.f32 %v679, %v696
  %v698 = vadd.f32 %v697, 0.4994258
  %v699 = vmul.f32 %v679, %v698
  %v700 = vadd.f32 %v699, 1.0
  %v701 = vrcp.pop %v700
  %v702 = vmul.f32 %v700, %v701
  %v703 = vsub.f32 1.0, %v702
  %v704 = vmul.f32 %v701, %v703
  %v705 = vadd.f32 %v701, %v704
  %vm706 = vweird.f32 %v700
  %vm707 = vweird.f32 %v701
  %vm708 = vmor %vm706, %vm707
  %v709 = vsel %vm708, %v701, %v705
  %v710 = vand.u32 2147483647, %v700
  %vm711 = vcmp.eq.f32.partialorder %v710, 8.507059e+37
  %v712 = vand.u32 %v700, 2147483648
  %v713 = vor.u32 1.1754944e-38, %v712
  %v714 = vsel %vm711, %v713, %v709
  %v715 = vmul.f32 %v690, %v714
  %v716 = vmin.f32 %v715, 1.0
  %v717 = vmax.f32 %v716, -1.0
  %v718 = vmul.f32 %v117, %v117
  %v719 = vmin.f32 16.0, %v718
  %v720 = vmul.f32 %v719, 2.1237322e-06
  %v721 = vadd.f32 %v720, 0.00028619796
  %v722 = vmul.f32 %v719, %v721
  %v723 = vadd.f32 %v722, 0.0036580483
  %v724 = vmul.f32 %v719, %v723
  %v725 = vadd.f32 %v724, 0.05243302
  %v726 = vmul.f32 %v719, %v725
  %v727 = vadd.f32 %v726, 0.18741608
  %v728 = vmul.f32 %v719, %v727
  %v729 = vadd.f32 %v728, 1.1283791
  %v730 = vmul.f32 %v117, %v729
  %v731 = vmul.f32 %v719, 3.8918573e-05
  %v732 = vadd.f32 %v731, 0.001143296
  %v733 = vmul.f32 %v719, %v732
  %v734 = vadd.f32 %v733, 0.014752088
  %v735 = vmul.f32 %v719, %v734
  %v736 = vadd.f32 %v735, 0.112945676
  %v737 = vmul.f32 %v719, %v736
  %v738 = vadd.f32 %v737, 0.4994258
  %v739 = vmul.f32 %v719, %v738
  %v740 = vadd.f32 %v739, 1.0
  %v741 = vrcp.pop %v740
  %v742 = vmul.f32 %v740, %v741
  %v743 = vsub.f32 1.0, %v742
  %v744 = vmul.f32 %v741, %v743
  %v745 = vadd.f32 %v741, %v744
  %vm746 = vweird.f32 %v740
  %vm747 = vweird.f32 %v741
  %vm748 = vmor %vm746, %vm747
  %v749 = vsel %vm748, %v741, %v745
  %v750 = vand.u32 2147483647, %v740
  %vm751 = vcmp.eq.f32.partialorder %v750, 8.507059e+37
  %v752 = vand.u32 %v740, 2147483648
  %v753 = vor.u32 1.1754944e-38, %v752
  %v754 = vsel %vm751, %v753, %v749
  %v755 = vmul.f32 %v730, %v754
  %v756 = vmin.f32 %v755, 1.0
  %v757 = vmax.f32 %v756, -1.0
  %v758 = vadd.f32 %v157, 1.0
  %v759 = vadd.f32 %v197, 1.0
  %v760 = vadd.f32 %v237, 1.0
  %v761 = vadd.f32 %v277, 1.0
  %v762 = vadd.f32 %v317, 1.0
  %v763 = vadd.f32 %v357, 1.0
  %v764 = vadd.f32 %v397, 1.0
  %v765 = vadd.f32 %v437, 1.0
  %v766 = vadd.f32 %v477, 1.0
  %v767 = vadd.f32 %v517, 1.0
  %v768 = vadd.f32 %v557, 1.0
  %v769 = vadd.f32 %v597, 1.0
  %v770 = vadd.f32 %v637, 1.0
  %v771 = vadd.f32 %v677, 1.0
  %v772 = vadd.f32 %v717, 1.0
  %v773 = vadd.f32 %v757, 1.0
  %v774 = vmul.f32 %v86, %v758
  %v775 = vmul.f32 %v87, %v759
  %v776 = vmul.f32 %v88, %v760
  %v777 = vmul.f32 %v89, %v761
  %v778 = vmul.f32 %v90, %v762
  %v779 = vmul.f32 %v91, %v763
  %v780 = vmul.f32 %v92, %v764
  %v781 = vmul.f32 %v93, %v765
  %v782 = vmul.f32 %v94, %v766
  %v783 = vmul.f32 %v95, %v767
  %v784 = vmul.f32 %v96, %v768
  %v785 = vmul.f32 %v97, %v769
  %v786 = vmul.f32 %v98, %v770
  %v787 = vmul.f32 %v99, %v771
  %v788 = vmul.f32 %v100, %v772
  %v789 = vmul.f32 %v101, %v773
  %790 = vst [vmem:[%s3] sm:$0xff] %v774
  %791 = vst [vmem:[%s3 + $0x8] sm:$0xff] %v775
  %792 = vst [vmem:[%s3 + $0x10] sm:$0xff] %v776
  %793 = vst [vmem:[%s3 + $0x18] sm:$0xff] %v777
  %794 = vst [vmem:[%s3 + $0x20] sm:$0xff] %v778
  %795 = vst [vmem:[%s3 + $0x28] sm:$0xff] %v779
  %796 = vst [vmem:[%s3 + $0x30] sm:$0xff] %v780
  %797 = vst [vmem:[%s3 + $0x38] sm:$0xff] %v781
  %798 = vst [vmem:[%s3 + $0x40] sm:$0xff] %v782
  %799 = vst [vmem:[%s3 + $0x48] sm:$0xff] %v783
  %800 = vst [vmem:[%s3 + $0x50] sm:$0xff] %v784
  %801 = vst [vmem:[%s3 + $0x58] sm:$0xff] %v785
  %802 = vst [vmem:[%s3 + $0x60] sm:$0xff] %v786
  %803 = vst [vmem:[%s3 + $0x68] sm:$0xff] %v787
  %804 = vst [vmem:[%s3 + $0x70] sm:$0xff] %v788
  %805 = vst [vmem:[%s3 + $0x78] sm:$0xff] %v789
  // Predicated region
  $region14: #{vae_unit_encoder.3} parent=0 // pred_check
    _
  $region15: #{vae_unit_encoder.3} parent=0 // pred_check_branch
    %807 = sbr.rel (0) target = $region17
  $region16: #{vae_unit_encoder.3} parent=0 // pred_region
    _
  $region17: #{vae_unit_encoder.3} parent=0 // pred_fallthru
    _
  // Predicated region
  $region18: #{vae_unit_encoder.3} parent=0 // pred_check
    _
  $region19: #{vae_unit_encoder.3} parent=0 // pred_check_branch
    %809 = sbr.rel (0) target = $region21
  $region20: #{vae_unit_encoder.3} parent=0 // pred_region
    _
  $region21: #{vae_unit_encoder.3} parent=0 // pred_fallthru
    _

// kernel: vae_unit_encoder.2
$region0: #{vae_unit_encoder.2}
  #allocation0 [shape = 'u32[]', space=smem, size = 0x4, offset = 0x4, fixed_abs, tag = 'smem constant byte address 0x4 - core index']
  #allocation1 [shape = 'u32[72,128]{1,0:T(1,128)}', space=vmem, size = 0x9000, scoped, tag = 'internal scratch']
  %s0 = inlined_call_operand.vmem [shape: bf16[128,128], index: 0, kind: input, shape index: {}]
  %s1 = inlined_call_operand.vmem [shape: bf16[128,128], index: 1, kind: input, shape index: {}]
  %s2 = inlined_call_operand.vmem [shape: bf16[128,128], index: 2, kind: output, shape index: {0}]
  %s3 = inlined_call_operand.vmem [shape: f32[1,2,128], index: 3, kind: output, shape index: {1}]
  %4 = xla_tuple %s2, %s3
  %s5 = sld [smem:[#allocation0]]
  $region26: #{vae_unit_encoder.2} parent=0
    _
  %s7 = ssub.s32 1, %s5
  %s8 = scalar_select 0, %s7, %s5
  // Predicated region
  $region2: #{vae_unit_encoder.2} parent=0 // pred_check
    _
  $region3: #{vae_unit_encoder.2} parent=0 // pred_check_branch
    %10 = sbr.rel (0) target = $region5
  $region4: #{vae_unit_encoder.2} parent=0 // pred_region
    _
  $region5: #{vae_unit_encoder.2} parent=0 // pred_fallthru
    _
  // Predicated region
  $region6: #{vae_unit_encoder.2} parent=0 // pred_check
    _
  $region7: #{vae_unit_encoder.2} parent=0 // pred_check_branch
    %12 = sbr.rel (0) target = $region9
  $region8: #{vae_unit_encoder.2} parent=0 // pred_region
    _
  $region9: #{vae_unit_encoder.2} parent=0 // pred_fallthru
    _
  %v13 = vld [vmem:[%s0] sm:$0xf]
  %v14 = vld [vmem:[%s0 + $0x4] sm:$0xf]
  %v15 = vld [vmem:[%s0 + $0x8] sm:$0xf]
  %v16 = vld [vmem:[%s0 + $0xc] sm:$0xf]
  %v17 = vld [vmem:[%s0 + $0x10] sm:$0xf]
  %v18 = vld [vmem:[%s0 + $0x14] sm:$0xf]
  %v19 = vld [vmem:[%s0 + $0x18] sm:$0xf]
  %v20 = vld [vmem:[%s0 + $0x1c] sm:$0xf]
  %v21 = vld [vmem:[%s0 + $0x20] sm:$0xf]
  %v22 = vld [vmem:[%s0 + $0x24] sm:$0xf]
  %v23 = vld [vmem:[%s0 + $0x28] sm:$0xf]
  %v24 = vld [vmem:[%s0 + $0x2c] sm:$0xf]
  %v25 = vld [vmem:[%s0 + $0x30] sm:$0xf]
  %v26 = vld [vmem:[%s0 + $0x34] sm:$0xf]
  %v27 = vld [vmem:[%s0 + $0x38] sm:$0xf]
  %v28 = vld [vmem:[%s0 + $0x3c] sm:$0xf]
  %v29 = vld [vmem:[%s1] sm:$0xf]
  %v30 = vld [vmem:[%s1 + $0x4] sm:$0xf]
  %v31 = vld [vmem:[%s1 + $0x8] sm:$0xf]
  %v32 = vld [vmem:[%s1 + $0xc] sm:$0xf]
  %v33 = vld [vmem:[%s1 + $0x10] sm:$0xf]
  %v34 = vld [vmem:[%s1 + $0x14] sm:$0xf]
  %v35 = vld [vmem:[%s1 + $0x18] sm:$0xf]
  %v36 = vld [vmem:[%s1 + $0x1c] sm:$0xf]
  %v37 = vld [vmem:[%s1 + $0x20] sm:$0xf]
  %v38 = vld [vmem:[%s1 + $0x24] sm:$0xf]
  %v39 = vld [vmem:[%s1 + $0x28] sm:$0xf]
  %v40 = vld [vmem:[%s1 + $0x2c] sm:$0xf]
  %v41 = vld [vmem:[%s1 + $0x30] sm:$0xf]
  %v42 = vld [vmem:[%s1 + $0x34] sm:$0xf]
  %v43 = vld [vmem:[%s1 + $0x38] sm:$0xf]
  %v44 = vld [vmem:[%s1 + $0x3c] sm:$0xf]
  %v61 = vunpack.c.l.b16 %v13
  %v62 = vunpack.c.l.b16 %v14
  %v63 = vunpack.c.l.b16 %v15
  %v64 = vunpack.c.l.b16 %v16
  %v65 = vunpack.c.l.b16 %v17
  %v66 = vunpack.c.l.b16 %v18
  %v67 = vunpack.c.l.b16 %v19
  %v68 = vunpack.c.l.b16 %v20
  %v69 = vunpack.c.l.b16 %v21
  %v70 = vunpack.c.l.b16 %v22
  %v71 = vunpack.c.l.b16 %v23
  %v72 = vunpack.c.l.b16 %v24
  %v73 = vunpack.c.l.b16 %v25
  %v74 = vunpack.c.l.b16 %v26
  %v75 = vunpack.c.l.b16 %v27
  %v76 = vunpack.c.l.b16 %v28
  %v77 = vpack.c.b16 %v62, %v61
  %v78 = vpack.c.b16 %v64, %v63
  %v79 = vpack.c.b16 %v66, %v65
  %v80 = vpack.c.b16 %v68, %v67
  %v81 = vpack.c.b16 %v70, %v69
  %v82 = vpack.c.b16 %v72, %v71
  %v83 = vpack.c.b16 %v74, %v73
  %v84 = vpack.c.b16 %v76, %v75
  %v109 = vunpack.c.l.b16 %v29
  %v110 = vunpack.c.l.b16 %v30
  %v111 = vunpack.c.l.b16 %v31
  %v112 = vunpack.c.l.b16 %v32
  %v113 = vunpack.c.l.b16 %v33
  %v114 = vunpack.c.l.b16 %v34
  %v115 = vunpack.c.l.b16 %v35
  %v116 = vunpack.c.l.b16 %v36
  %v117 = vunpack.c.l.b16 %v37
  %v118 = vunpack.c.l.b16 %v38
  %v119 = vunpack.c.l.b16 %v39
  %v120 = vunpack.c.l.b16 %v40
  %v121 = vunpack.c.l.b16 %v41
  %v122 = vunpack.c.l.b16 %v42
  %v123 = vunpack.c.l.b16 %v43
  %v124 = vunpack.c.l.b16 %v44
  %v125 = vpack.c.b16 %v110, %v109
  %v126 = vpack.c.b16 %v112, %v111
  %v127 = vpack.c.b16 %v114, %v113
  %v128 = vpack.c.b16 %v116, %v115
  %v129 = vpack.c.b16 %v118, %v117
  %v130 = vpack.c.b16 %v120, %v119
  %v131 = vpack.c.b16 %v122, %v121
  %v132 = vpack.c.b16 %v124, %v123
  %141 = vmatpush.bf16.msra.mxu0 %v132
  %142 = vmatpush.bf16.msra.mxu0 %v131
  %143 = vmatpush.bf16.msra.mxu0 %v130
  %144 = vmatpush.bf16.msra.mxu0 %v129
  %145 = vmatpush.bf16.msra.mxu0 %v128
  %146 = vmatpush.bf16.msra.mxu0 %v127
  %147 = vmatpush.bf16.msra.mxu0 %v126
  %148 = vmatpush.bf16.msra.mxu0 %v125
  %149 = vmatmul.bf16.gmra.mxu0 %v77
  %v150 = vpop.f32.mrf.mxu0
  %v151 = vadd.f32 0.0, %v150
  %v152 = vpop.f32.mrf.mxu0
  %v153 = vadd.f32 0.0, %v152
  %154 = vmatmul.bf16.gmra.mxu0 %v78
  %v155 = vpop.f32.mrf.mxu0
  %v156 = vadd.f32 0.0, %v155
  %v157 = vpop.f32.mrf.mxu0
  %v158 = vadd.f32 0.0, %v157
  %159 = vmatmul.bf16.gmra.mxu0 %v79
  %v160 = vpop.f32.mrf.mxu0
  %v161 = vadd.f32 0.0, %v160
  %v162 = vpop.f32.mrf.mxu0
  %v163 = vadd.f32 0.0, %v162
  %164 = vmatmul.bf16.gmra.mxu0 %v80
  %v165 = vpop.f32.mrf.mxu0
  %v166 = vadd.f32 0.0, %v165
  %v167 = vpop.f32.mrf.mxu0
  %v168 = vadd.f32 0.0, %v167
  %169 = vmatmul.bf16.gmra.mxu0 %v81
  %v170 = vpop.f32.mrf.mxu0
  %v171 = vadd.f32 0.0, %v170
  %v172 = vpop.f32.mrf.mxu0
  %v173 = vadd.f32 0.0, %v172
  %174 = vmatmul.bf16.gmra.mxu0 %v82
  %v175 = vpop.f32.mrf.mxu0
  %v176 = vadd.f32 0.0, %v175
  %v177 = vpop.f32.mrf.mxu0
  %v178 = vadd.f32 0.0, %v177
  %179 = vmatmul.bf16.gmra.mxu0 %v83
  %v180 = vpop.f32.mrf.mxu0
  %v181 = vadd.f32 0.0, %v180
  %v182 = vpop.f32.mrf.mxu0
  %v183 = vadd.f32 0.0, %v182
  %184 = vmatmul.bf16.gmra.mxu0 %v84
  %v185 = vpop.f32.mrf.mxu0
  %v186 = vadd.f32 0.0, %v185
  %v187 = vpop.f32.mrf.mxu0
  %v188 = vadd.f32 0.0, %v187
  %189 = vdwg.mxu0
  %v190 = vpack.c.bf16 %v151, %v151
  %v191 = vpack.c.bf16 %v153, %v153
  %v192 = vpack.c.bf16 %v156, %v156
  %v193 = vpack.c.bf16 %v158, %v158
  %v194 = vpack.c.bf16 %v161, %v161
  %v195 = vpack.c.bf16 %v163, %v163
  %v196 = vpack.c.bf16 %v166, %v166
  %v197 = vpack.c.bf16 %v168, %v168
  %v198 = vpack.c.bf16 %v171, %v171
  %v199 = vpack.c.bf16 %v173, %v173
  %v200 = vpack.c.bf16 %v176, %v176
  %v201 = vpack.c.bf16 %v178, %v178
  %v202 = vpack.c.bf16 %v181, %v181
  %v203 = vpack.c.bf16 %v183, %v183
  %v204 = vpack.c.bf16 %v186, %v186
  %v205 = vpack.c.bf16 %v188, %v188
  %206 = vst [vmem:[%s2] sm:$0xf] %v190
  %207 = vst [vmem:[%s2 + $0x4] sm:$0xf] %v191
  %208 = vst [vmem:[%s2 + $0x8] sm:$0xf] %v192
  %209 = vst [vmem:[%s2 + $0xc] sm:$0xf] %v193
  %210 = vst [vmem:[%s2 + $0x10] sm:$0xf] %v194
  %211 = vst [vmem:[%s2 + $0x14] sm:$0xf] %v195
  %212 = vst [vmem:[%s2 + $0x18] sm:$0xf] %v196
  %213 = vst [vmem:[%s2 + $0x1c] sm:$0xf] %v197
  %214 = vst [vmem:[%s2 + $0x20] sm:$0xf] %v198
  %215 = vst [vmem:[%s2 + $0x24] sm:$0xf] %v199
  %216 = vst [vmem:[%s2 + $0x28] sm:$0xf] %v200
  %217 = vst [vmem:[%s2 + $0x2c] sm:$0xf] %v201
  %218 = vst [vmem:[%s2 + $0x30] sm:$0xf] %v202
  %219 = vst [vmem:[%s2 + $0x34] sm:$0xf] %v203
  %220 = vst [vmem:[%s2 + $0x38] sm:$0xf] %v204
  %221 = vst [vmem:[%s2 + $0x3c] sm:$0xf] %v205
  %v222 = vunpack.c.l.bf16 %v190
  %v223 = vunpack.c.l.bf16 %v191
  %v224 = vunpack.c.l.bf16 %v192
  %v225 = vunpack.c.l.bf16 %v193
  %v226 = vunpack.c.l.bf16 %v194
  %v227 = vunpack.c.l.bf16 %v195
  %v228 = vunpack.c.l.bf16 %v196
  %v229 = vunpack.c.l.bf16 %v197
  %v230 = vunpack.c.l.bf16 %v198
  %v231 = vunpack.c.l.bf16 %v199
  %v232 = vunpack.c.l.bf16 %v200
  %v233 = vunpack.c.l.bf16 %v201
  %v234 = vunpack.c.l.bf16 %v202
  %v235 = vunpack.c.l.bf16 %v203
  %v236 = vunpack.c.l.bf16 %v204
  %v237 = vunpack.c.l.bf16 %v205
  %v238 = vadd.f32 %v222, %v223
  %v239 = vadd.f32 %v238, %v224
  %v240 = vadd.f32 %v239, %v225
  %v241 = vadd.f32 %v240, %v226
  %v242 = vadd.f32 %v241, %v227
  %v243 = vadd.f32 %v242, %v228
  %v244 = vadd.f32 %v243, %v229
  %v245 = vadd.f32 %v244, %v230
  %v246 = vadd.f32 %v245, %v231
  %v247 = vadd.f32 %v246, %v232
  %v248 = vadd.f32 %v247, %v233
  %v249 = vadd.f32 %v248, %v234
  %v250 = vadd.f32 %v249, %v235
  %v251 = vadd.f32 %v250, %v236
  %v252 = vadd.f32 %v251, %v237
  %v253 = vrot.slane %v252, 4
  %v254 = vadd.f32 %v252, %v253
  %v255 = vrot.slane %v254, 2
  %v256 = vadd.f32 %v254, %v255
  %v257 = vrot.slane %v256, 1
  %v258 = vadd.f32 %v256, %v257
  %v259 = vmul.f32 %v258, 0.0078125
  %v260 = vsub.f32 %v222, %v259
  %v261 = vsub.f32 %v223, %v259
  %v262 = vsub.f32 %v224, %v259
  %v263 = vsub.f32 %v225, %v259
  %v264 = vsub.f32 %v226, %v259
  %v265 = vsub.f32 %v227, %v259
  %v266 = vsub.f32 %v228, %v259
  %v267 = vsub.f32 %v229, %v259
  %v268 = vsub.f32 %v230, %v259
  %v269 = vsub.f32 %v231, %v259
  %v270 = vsub.f32 %v232, %v259
  %v271 = vsub.f32 %v233, %v259
  %v272 = vsub.f32 %v234, %v259
  %v273 = vsub.f32 %v235, %v259
  %v274 = vsub.f32 %v236, %v259
  %v275 = vsub.f32 %v237, %v259
  %v276 = vmul.f32 %v260, %v260
  %v277 = vmul.f32 %v261, %v261
  %v278 = vmul.f32 %v262, %v262
  %v279 = vmul.f32 %v263, %v263
  %v280 = vmul.f32 %v264, %v264
  %v281 = vmul.f32 %v265, %v265
  %v282 = vmul.f32 %v266, %v266
  %v283 = vmul.f32 %v267, %v267
  %v284 = vmul.f32 %v268, %v268
  %v285 = vmul.f32 %v269, %v269
  %v286 = vmul.f32 %v270, %v270
  %v287 = vmul.f32 %v271, %v271
  %v288 = vmul.f32 %v272, %v272
  %v289 = vmul.f32 %v273, %v273
  %v290 = vmul.f32 %v274, %v274
  %v291 = vmul.f32 %v275, %v275
  %v292 = vadd.f32 %v276, %v277
  %v293 = vadd.f32 %v292, %v278
  %v294 = vadd.f32 %v293, %v279
  %v295 = vadd.f32 %v294, %v280
  %v296 = vadd.f32 %v295, %v281
  %v297 = vadd.f32 %v296, %v282
  %v298 = vadd.f32 %v297, %v283
  %v299 = vadd.f32 %v298, %v284
  %v300 = vadd.f32 %v299, %v285
  %v301 = vadd.f32 %v300, %v286
  %v302 = vadd.f32 %v301, %v287
  %v303 = vadd.f32 %v302, %v288
  %v304 = vadd.f32 %v303, %v289
  %v305 = vadd.f32 %v304, %v290
  %v306 = vadd.f32 %v305, %v291
  %v307 = vrot.slane %v306, 4
  %v308 = vadd.f32 %v306, %v307
  %v309 = vrot.slane %v308, 2
  %v310 = vadd.f32 %v308, %v309
  %v311 = vrot.slane %v310, 1
  %v312 = vadd.f32 %v310, %v311
  %vm313 = vcmask 1040384
  %v314 = vsel %vm313, %v258, %v312
  %315 = vst [vmem:[%s3] sm:$0x3] %v314
  // Predicated region
  $region10: #{vae_unit_encoder.2} parent=0 // pred_check
    _
  $region11: #{vae_unit_encoder.2} parent=0 // pred_check_branch
    %317 = sbr.rel (0) target = $region13
  $region12: #{vae_unit_encoder.2} parent=0 // pred_region
    _
  $region13: #{vae_unit_encoder.2} parent=0 // pred_fallthru
    _
  // Predicated region
  $region14: #{vae_unit_encoder.2} parent=0 // pred_check
    _
  $region15: #{vae_unit_encoder.2} parent=0 // pred_check_branch
    %319 = sbr.rel (0) target = $region17
  $region16: #{vae_unit_encoder.2} parent=0 // pred_region
    _
  $region17: #{vae_unit_encoder.2} parent=0 // pred_fallthru
    _
  // Predicated region
  $region18: #{vae_unit_encoder.2} parent=0 // pred_check
    _
  $region19: #{vae_unit_encoder.2} parent=0 // pred_check_branch
    %321 = sbr.rel (0) target = $region21
  $region20: #{vae_unit_encoder.2} parent=0 // pred_region
    _
  $region21: #{vae_unit_encoder.2} parent=0 // pred_fallthru
    _
  // Predicated region
  $region22: #{vae_unit_encoder.2} parent=0 // pred_check
    _
  $region23: #{vae_unit_encoder.2} parent=0 // pred_check_branch
    %323 = sbr.rel (0) target = $region25
  $region24: #{vae_unit_encoder.2} parent=0 // pred_region
    _
  $region25: #{vae_unit_encoder.2} parent=0 // pred_fallthru
    _

</llo_original>
